<compile_context>
chip_gen: v5e
topology: v5e:2x2
jax: 0.10.0
libtpu: 0.0.40
codegen_flags: <defaults>
</compile_context>

<pallas_src>
import jax
import jax.numpy as jnp
from jax.experimental import pallas as pl
from jax.experimental.pallas import tpu as pltpu


def _ncf_mlp_kernel(u_ref, i_ref, g_ref, l_ref, a_ref, s_ref,
                    w1_ref, b1_ref, w2_ref, b2_ref, w3r_ref, b3_ref,
                    out_ref):
    F = u_ref.shape[-1]

    # ---- fused concat + fc1: relu( sum_k e_k @ W1[k*F:(k+1)*F, :] + b1 ) ----
    acc = jnp.dot(u_ref[...], w1_ref[0:F, :],
                  preferred_element_type=jnp.float32)
    for k, e_ref in enumerate((i_ref, g_ref, l_ref, a_ref, s_ref), start=1):
        acc = acc + jnp.dot(e_ref[...], w1_ref[k * F:(k + 1) * F, :],
                            preferred_element_type=jnp.float32)
    h1 = jnp.maximum(acc + b1_ref[...], 0.0)                    # f32 [tb, 64]

    # ---- fc2 + relu (operands in compute dtype, f32 accumulation) ----
    h2 = jnp.dot(h1.astype(w2_ref.dtype), w2_ref[...],
                 preferred_element_type=jnp.float32) + b2_ref[...]
    h2 = jnp.maximum(h2, 0.0)                                   # f32 [tb, 32]

    # ---- fc3 (N=1): VPU multiply + lane reduction instead of MXU matmul ----
    w3_row = w3r_ref[...].astype(jnp.float32)                   # [1, 32]
    logits = jnp.sum(h2 * w3_row, axis=-1, keepdims=True) + b3_ref[...]

    out_ref[...] = jax.nn.sigmoid(logits)                       # f32 [tb, 1]


def ncf_mlp_pallas(embs, w1, b1, w2, b2, w3_row, b3, *, tile_b=1024):
    """embs: 6 arrays [B, F]; weights stored [in, out]; w3_row is [1, H2]."""
    B, F = embs[0].shape
    H1 = w1.shape[1]
    H2 = w2.shape[1]

    # Sublane-legal batch tile: multiple of 8 (f32) / 16 (bf16), or the full
    # batch if it already fits in one tile.
    sub = 16 if jnp.dtype(embs[0].dtype).itemsize < 4 else 8
    if B <= tile_b:
        tile_b = B                       # full-dim block is always legal
    else:
        tile_b = max(sub, (tile_b // sub) * sub)

    grid = (pl.cdiv(B, tile_b),)

    emb_spec = pl.BlockSpec((tile_b, F), lambda i: (i, 0))
    const = lambda shape: pl.BlockSpec(shape, lambda i: (0, 0))

    return pl.pallas_call(
        _ncf_mlp_kernel,
        out_shape=jax.ShapeDtypeStruct((B, 1), jnp.float32),
        grid_spec=pltpu.PrefetchScalarGridSpec(
            num_scalar_prefetch=0,
            grid=grid,
            in_specs=[emb_spec] * 6 + [
                const((6 * F, H1)),   # w1
                const((1, H1)),       # b1 (f32)
                const((H1, H2)),      # w2
                const((1, H2)),       # b2 (f32)
                const((1, H2)),       # w3 row
                const((1, 1)),        # b3 (f32)
            ],
            out_specs=pl.BlockSpec((tile_b, 1), lambda i: (i, 0)),
        ),
        compiler_params=pltpu.CompilerParams(
            dimension_semantics=("parallel",),   # batch tiles are independent
        ),
    )(*embs, w1, b1, w2, b2, w3_row, b3)


class NCFWithDemographicsPallas:
    def __init__(self, n_users, n_items, n_factors, n_genres, n_languages, key,
                 compute_dtype=jnp.float32):
        self.compute_dtype = compute_dtype
        ks = jax.random.split(key, 12)

        def emb(k, n, d):
            # torch.nn.Embedding default init: N(0, 1)
            return jax.random.normal(k, (n, d), dtype=jnp.float32)

        def linear(kw, kb, fan_in, fan_out):
            # torch.nn.Linear default init: U(-1/sqrt(fan_in), 1/sqrt(fan_in))
            bound = 1.0 / jnp.sqrt(float(fan_in))
            w = jax.random.uniform(kw, (fan_in, fan_out), jnp.float32, -bound, bound)
            b = jax.random.uniform(kb, (1, fan_out), jnp.float32, -bound, bound)
            return w, b

        self.user_embedding = emb(ks[0], n_users, n_factors)
        self.item_embedding = emb(ks[1], n_items, n_factors)
        self.genre_embedding = emb(ks[2], n_genres, n_factors)
        self.language_embedding = emb(ks[3], 100 if False else n_languages, n_factors)
        self.age_embedding = emb(ks[4], 100, n_factors)
        self.gender_embedding = emb(ks[5], 2, n_factors)

        self.w1, self.b1 = linear(ks[6], ks[7], n_factors * 6, 64)
        self.w2, self.b2 = linear(ks[8], ks[9], 64, 32)
        self.w3, self.b3 = linear(ks[10], ks[11], 32, 1)   # w3: [32, 1]

    def __call__(self, user_id, item_id, genre_id, language_id, age, gender,
                 *, tile_b=1024):
        cd = self.compute_dtype
        # Embedding gathers stay in plain JAX (glue); streams are handed to the
        # kernel separately -- no [B, 6F] concatenate materialized in HBM.
        embs = [
            jnp.take(self.user_embedding, user_id, axis=0).astype(cd),
            jnp.take(self.item_embedding, item_id, axis=0).astype(cd),
            jnp.take(self.genre_embedding, genre_id, axis=0).astype(cd),
            jnp.take(self.language_embedding, language_id, axis=0).astype(cd),
            jnp.take(self.age_embedding, age, axis=0).astype(cd),
            jnp.take(self.gender_embedding, gender, axis=0).astype(cd),
        ]
        w1 = self.w1.astype(cd)
        w2 = self.w2.astype(cd)
        w3_row = self.w3.T.astype(cd)            # [1, 32] for the VPU reduction
        # Biases stay f32: all epilogue elementwise math runs on the f32
        # accumulator (v5e has no bf16 VPU/EUP).
        return ncf_mlp_pallas(embs, w1, self.b1, w2, self.b2, w3_row, self.b3,
                              tile_b=tile_b)

    def reference(self, user_id, item_id, genre_id, language_id, age, gender):
        # Pure-JAX f32 reference matching the PyTorch module.
        x = jnp.concatenate(
            [
                jnp.take(self.user_embedding, user_id, axis=0),
                jnp.take(self.item_embedding, item_id, axis=0),
                jnp.take(self.genre_embedding, genre_id, axis=0),
                jnp.take(self.language_embedding, language_id, axis=0),
                jnp.take(self.age_embedding, age, axis=0),
                jnp.take(self.gender_embedding, gender, axis=0),
            ],
            axis=1,
        )
        h1 = jax.nn.relu(x @ self.w1 + self.b1)
        h2 = jax.nn.relu(h1 @ self.w2 + self.b2)
        return jax.nn.sigmoid(h2 @ self.w3 + self.b3)


if __name__ == "__main__":
    n_users, n_items, n_factors, n_genres, n_languages = 32, 48, 16, 10, 5
    B = 32

    key = jax.random.PRNGKey(0)
    kmodel, ku, ki, kg, kl, ka, kge = jax.random.split(key, 7)

    user_id = jax.random.randint(ku, (B,), 0, n_users, dtype=jnp.int32)
    item_id = jax.random.randint(ki, (B,), 0, n_items, dtype=jnp.int32)
    genre_id = jax.random.randint(kg, (B,), 0, n_genres, dtype=jnp.int32)
    language_id = jax.random.randint(kl, (B,), 0, n_languages, dtype=jnp.int32)
    age = jax.random.randint(ka, (B,), 0, 100, dtype=jnp.int32)
    gender = jax.random.randint(kge, (B,), 0, 2, dtype=jnp.int32)

    # ---- f32 path, multi-step batch grid (exercises pipelining: grid=(4,)) ----
    model = NCFWithDemographicsPallas(
        n_users, n_items, n_factors, n_genres, n_languages, kmodel
    )
    out = model(user_id, item_id, genre_id, language_id, age, gender, tile_b=8)
    out = jax.block_until_ready(out)

    ref = model.reference(user_id, item_id, genre_id, language_id, age, gender)
    ref = jax.block_until_ready(ref)

    assert out.shape == (B, 1)
    assert jnp.allclose(out, ref, atol=1e-5, rtol=1e-5)

    # ---- bf16 compute path (halves HBM bytes on v6e/v7x), f32 accumulation ----
    model_bf16 = NCFWithDemographicsPallas(
        n_users, n_items, n_factors, n_genres, n_languages, kmodel,
        compute_dtype=jnp.bfloat16,
    )
    out_bf16 = model_bf16(user_id, item_id, genre_id, language_id, age, gender,
                          tile_b=16)
    out_bf16 = jax.block_until_ready(out_bf16)

    assert out_bf16.shape == (B, 1)
    assert jnp.allclose(out_bf16, ref, atol=5e-2, rtol=5e-2)

    print("KERNEL_OK")
</pallas_src>

<mosaic_0001>
module attributes {stable_mosaic.version = 11 : i64} {
  func.func @_ncf_mlp_kernel(%arg0: i32, %arg1: memref<8x16xf32, #tpu.memory_space<vmem>>, %arg2: memref<8x16xf32, #tpu.memory_space<vmem>>, %arg3: memref<8x16xf32, #tpu.memory_space<vmem>>, %arg4: memref<8x16xf32, #tpu.memory_space<vmem>>, %arg5: memref<8x16xf32, #tpu.memory_space<vmem>>, %arg6: memref<8x16xf32, #tpu.memory_space<vmem>>, %arg7: memref<96x64xf32, #tpu.memory_space<vmem>>, %arg8: memref<1x64xf32, #tpu.memory_space<vmem>>, %arg9: memref<64x32xf32, #tpu.memory_space<vmem>>, %arg10: memref<1x32xf32, #tpu.memory_space<vmem>>, %arg11: memref<1x32xf32, #tpu.memory_space<vmem>>, %arg12: memref<1x1xf32, #tpu.memory_space<vmem>>, %arg13: memref<8x1xf32, #tpu.memory_space<vmem>>) attributes {dimension_semantics = [#tpu.dimension_semantics<parallel>], iteration_bounds = array<i64: 4>, scalar_prefetch = 0 : i64, scratch_operands = 0 : i64, tpu.core_type = #tpu.core_type<tc>, window_params = [{transform_indices = @transform_0, window_bounds = array<i64: 8, 16>}, {transform_indices = @transform_1, window_bounds = array<i64: 8, 16>}, {transform_indices = @transform_2, window_bounds = array<i64: 8, 16>}, {transform_indices = @transform_3, window_bounds = array<i64: 8, 16>}, {transform_indices = @transform_4, window_bounds = array<i64: 8, 16>}, {transform_indices = @transform_5, window_bounds = array<i64: 8, 16>}, {pipeline_mode = #tpu.pipeline_mode<synchronous>, transform_indices = @transform_6, window_bounds = array<i64: 96, 64>}, {pipeline_mode = #tpu.pipeline_mode<synchronous>, transform_indices = @transform_7, window_bounds = array<i64: 1, 64>}, {pipeline_mode = #tpu.pipeline_mode<synchronous>, transform_indices = @transform_8, window_bounds = array<i64: 64, 32>}, {pipeline_mode = #tpu.pipeline_mode<synchronous>, transform_indices = @transform_9, window_bounds = array<i64: 1, 32>}, {pipeline_mode = #tpu.pipeline_mode<synchronous>, transform_indices = @transform_10, window_bounds = array<i64: 1, 32>}, {pipeline_mode = #tpu.pipeline_mode<synchronous>, transform_indices = @transform_11, window_bounds = array<i64: 1, 1>}, {transform_indices = @transform_12, window_bounds = array<i64: 8, 1>}]} {
    %c0 = arith.constant 0 : index
    %c0_0 = arith.constant 0 : index
    %0 = vector.load %arg1[%c0, %c0_0] : memref<8x16xf32, #tpu.memory_space<vmem>>, vector<8x16xf32>
    %c0_1 = arith.constant 0 : index
    %c0_2 = arith.constant 0 : index
    %1 = vector.load %arg7[%c0_1, %c0_2] : memref<96x64xf32, #tpu.memory_space<vmem>>, vector<16x64xf32>
    %cst = arith.constant dense<0.000000e+00> : vector<8x64xf32>
    %2 = tpu.matmul %0, %1, %cst {dimension_numbers = #tpu.dot_dimension_numbers<[1], [0], [0], [1], [0, 0, 1, 1], [], []>} : vector<8x16xf32>, vector<16x64xf32>, vector<8x64xf32> -> vector<8x64xf32>
    %c0_3 = arith.constant 0 : index
    %c0_4 = arith.constant 0 : index
    %3 = vector.load %arg2[%c0_3, %c0_4] : memref<8x16xf32, #tpu.memory_space<vmem>>, vector<8x16xf32>
    %c16 = arith.constant 16 : index
    %c0_5 = arith.constant 0 : index
    %4 = vector.load %arg7[%c16, %c0_5] : memref<96x64xf32, #tpu.memory_space<vmem>>, vector<16x64xf32>
    %cst_6 = arith.constant dense<0.000000e+00> : vector<8x64xf32>
    %5 = tpu.matmul %3, %4, %cst_6 {dimension_numbers = #tpu.dot_dimension_numbers<[1], [0], [0], [1], [0, 0, 1, 1], [], []>} : vector<8x16xf32>, vector<16x64xf32>, vector<8x64xf32> -> vector<8x64xf32>
    %6 = arith.addf %2, %5 : vector<8x64xf32>
    %c0_7 = arith.constant 0 : index
    %c0_8 = arith.constant 0 : index
    %7 = vector.load %arg3[%c0_7, %c0_8] : memref<8x16xf32, #tpu.memory_space<vmem>>, vector<8x16xf32>
    %c32 = arith.constant 32 : index
    %c0_9 = arith.constant 0 : index
    %8 = vector.load %arg7[%c32, %c0_9] : memref<96x64xf32, #tpu.memory_space<vmem>>, vector<16x64xf32>
    %cst_10 = arith.constant dense<0.000000e+00> : vector<8x64xf32>
    %9 = tpu.matmul %7, %8, %cst_10 {dimension_numbers = #tpu.dot_dimension_numbers<[1], [0], [0], [1], [0, 0, 1, 1], [], []>} : vector<8x16xf32>, vector<16x64xf32>, vector<8x64xf32> -> vector<8x64xf32>
    %10 = arith.addf %6, %9 : vector<8x64xf32>
    %c0_11 = arith.constant 0 : index
    %c0_12 = arith.constant 0 : index
    %11 = vector.load %arg4[%c0_11, %c0_12] : memref<8x16xf32, #tpu.memory_space<vmem>>, vector<8x16xf32>
    %c48 = arith.constant 48 : index
    %c0_13 = arith.constant 0 : index
    %12 = vector.load %arg7[%c48, %c0_13] : memref<96x64xf32, #tpu.memory_space<vmem>>, vector<16x64xf32>
    %cst_14 = arith.constant dense<0.000000e+00> : vector<8x64xf32>
    %13 = tpu.matmul %11, %12, %cst_14 {dimension_numbers = #tpu.dot_dimension_numbers<[1], [0], [0], [1], [0, 0, 1, 1], [], []>} : vector<8x16xf32>, vector<16x64xf32>, vector<8x64xf32> -> vector<8x64xf32>
    %14 = arith.addf %10, %13 : vector<8x64xf32>
    %c0_15 = arith.constant 0 : index
    %c0_16 = arith.constant 0 : index
    %15 = vector.load %arg5[%c0_15, %c0_16] : memref<8x16xf32, #tpu.memory_space<vmem>>, vector<8x16xf32>
    %c64 = arith.constant 64 : index
    %c0_17 = arith.constant 0 : index
    %16 = vector.load %arg7[%c64, %c0_17] : memref<96x64xf32, #tpu.memory_space<vmem>>, vector<16x64xf32>
    %cst_18 = arith.constant dense<0.000000e+00> : vector<8x64xf32>
    %17 = tpu.matmul %15, %16, %cst_18 {dimension_numbers = #tpu.dot_dimension_numbers<[1], [0], [0], [1], [0, 0, 1, 1], [], []>} : vector<8x16xf32>, vector<16x64xf32>, vector<8x64xf32> -> vector<8x64xf32>
    %18 = arith.addf %14, %17 : vector<8x64xf32>
    %c0_19 = arith.constant 0 : index
    %c0_20 = arith.constant 0 : index
    %19 = vector.load %arg6[%c0_19, %c0_20] : memref<8x16xf32, #tpu.memory_space<vmem>>, vector<8x16xf32>
    %c80 = arith.constant 80 : index
    %c0_21 = arith.constant 0 : index
    %20 = vector.load %arg7[%c80, %c0_21] : memref<96x64xf32, #tpu.memory_space<vmem>>, vector<16x64xf32>
    %cst_22 = arith.constant dense<0.000000e+00> : vector<8x64xf32>
    %21 = tpu.matmul %19, %20, %cst_22 {dimension_numbers = #tpu.dot_dimension_numbers<[1], [0], [0], [1], [0, 0, 1, 1], [], []>} : vector<8x16xf32>, vector<16x64xf32>, vector<8x64xf32> -> vector<8x64xf32>
    %22 = arith.addf %18, %21 : vector<8x64xf32>
    %c0_23 = arith.constant 0 : index
    %c0_24 = arith.constant 0 : index
    %23 = vector.load %arg8[%c0_23, %c0_24] : memref<1x64xf32, #tpu.memory_space<vmem>>, vector<1x64xf32>
    %24 = vector.broadcast %23 : vector<1x64xf32> to vector<8x64xf32>
    %25 = arith.addf %22, %24 : vector<8x64xf32>
    %cst_25 = arith.constant 0.000000e+00 : f32
    %26 = vector.broadcast %cst_25 : f32 to vector<8x64xf32>
    %27 = arith.maximumf %25, %26 : vector<8x64xf32>
    %c0_26 = arith.constant 0 : index
    %c0_27 = arith.constant 0 : index
    %28 = vector.load %arg9[%c0_26, %c0_27] : memref<64x32xf32, #tpu.memory_space<vmem>>, vector<64x32xf32>
    %cst_28 = arith.constant dense<0.000000e+00> : vector<8x32xf32>
    %29 = tpu.matmul %27, %28, %cst_28 {dimension_numbers = #tpu.dot_dimension_numbers<[1], [0], [0], [1], [0, 0, 1, 1], [], []>} : vector<8x64xf32>, vector<64x32xf32>, vector<8x32xf32> -> vector<8x32xf32>
    %c0_29 = arith.constant 0 : index
    %c0_30 = arith.constant 0 : index
    %30 = vector.load %arg10[%c0_29, %c0_30] : memref<1x32xf32, #tpu.memory_space<vmem>>, vector<1x32xf32>
    %31 = vector.broadcast %30 : vector<1x32xf32> to vector<8x32xf32>
    %32 = arith.addf %29, %31 : vector<8x32xf32>
    %cst_31 = arith.constant 0.000000e+00 : f32
    %33 = vector.broadcast %cst_31 : f32 to vector<8x32xf32>
    %34 = arith.maximumf %32, %33 : vector<8x32xf32>
    %c0_32 = arith.constant 0 : index
    %c0_33 = arith.constant 0 : index
    %35 = vector.load %arg11[%c0_32, %c0_33] : memref<1x32xf32, #tpu.memory_space<vmem>>, vector<1x32xf32>
    %36 = vector.broadcast %35 : vector<1x32xf32> to vector<8x32xf32>
    %37 = arith.mulf %34, %36 : vector<8x32xf32>
    %cst_34 = arith.constant dense<0.000000e+00> : vector<8xf32>
    %38 = vector.multi_reduction <add>, %37, %cst_34 [1] : vector<8x32xf32> to vector<8xf32>
    %39 = vector.shape_cast %38 : vector<8xf32> to vector<8x1xf32>
    %c0_35 = arith.constant 0 : index
    %c0_36 = arith.constant 0 : index
    %40 = vector.load %arg12[%c0_35, %c0_36] : memref<1x1xf32, #tpu.memory_space<vmem>>, vector<1x1xf32>
    %41 = vector.broadcast %40 : vector<1x1xf32> to vector<8x1xf32>
    %42 = arith.addf %39, %41 : vector<8x1xf32>
    %43 = arith.negf %42 : vector<8x1xf32>
    %44 = math.exp %43 : vector<8x1xf32>
    %cst_37 = arith.constant 1.000000e+00 : f32
    %45 = vector.broadcast %cst_37 : f32 to vector<8x1xf32>
    %46 = arith.addf %45, %44 : vector<8x1xf32>
    %47 = arith.divf %45, %46 : vector<8x1xf32>
    %c0_38 = arith.constant 0 : index
    %c0_39 = arith.constant 0 : index
    %48 = vector.load %arg13[%c0_38, %c0_39] : memref<8x1xf32, #tpu.memory_space<vmem>>, vector<8x1xf32>
    tpu.vector_store %arg13[%c0_38, %c0_39], %47 {strides = array<i32>} : memref<8x1xf32, #tpu.memory_space<vmem>>, vector<8x1xf32>,
    return
  }
  func.func @transform_0(%arg0: i32) -> (i32, i32) {
    %c0_i32 = arith.constant 0 : i32
    %c0_i32_0 = arith.constant 0 : i32
    return %arg0, %c0_i32 : i32, i32
  }
  func.func @transform_1(%arg0: i32) -> (i32, i32) {
    %c0_i32 = arith.constant 0 : i32
    %c0_i32_0 = arith.constant 0 : i32
    return %arg0, %c0_i32 : i32, i32
  }
  func.func @transform_2(%arg0: i32) -> (i32, i32) {
    %c0_i32 = arith.constant 0 : i32
    %c0_i32_0 = arith.constant 0 : i32
    return %arg0, %c0_i32 : i32, i32
  }
  func.func @transform_3(%arg0: i32) -> (i32, i32) {
    %c0_i32 = arith.constant 0 : i32
    %c0_i32_0 = arith.constant 0 : i32
    return %arg0, %c0_i32 : i32, i32
  }
  func.func @transform_4(%arg0: i32) -> (i32, i32) {
    %c0_i32 = arith.constant 0 : i32
    %c0_i32_0 = arith.constant 0 : i32
    return %arg0, %c0_i32 : i32, i32
  }
  func.func @transform_5(%arg0: i32) -> (i32, i32) {
    %c0_i32 = arith.constant 0 : i32
    %c0_i32_0 = arith.constant 0 : i32
    return %arg0, %c0_i32 : i32, i32
  }
  func.func @transform_6(%arg0: i32) -> (i32, i32) {
    %c0_i32 = arith.constant 0 : i32
    %c0_i32_0 = arith.constant 0 : i32
    %c0_i32_1 = arith.constant 0 : i32
    return %c0_i32, %c0_i32_0 : i32, i32
  }
  func.func @transform_7(%arg0: i32) -> (i32, i32) {
    %c0_i32 = arith.constant 0 : i32
    %c0_i32_0 = arith.constant 0 : i32
    %c0_i32_1 = arith.constant 0 : i32
    return %c0_i32, %c0_i32_0 : i32, i32
  }
  func.func @transform_8(%arg0: i32) -> (i32, i32) {
    %c0_i32 = arith.constant 0 : i32
    %c0_i32_0 = arith.constant 0 : i32
    %c0_i32_1 = arith.constant 0 : i32
    return %c0_i32, %c0_i32_0 : i32, i32
  }
  func.func @transform_9(%arg0: i32) -> (i32, i32) {
    %c0_i32 = arith.constant 0 : i32
    %c0_i32_0 = arith.constant 0 : i32
    %c0_i32_1 = arith.constant 0 : i32
    return %c0_i32, %c0_i32_0 : i32, i32
  }
  func.func @transform_10(%arg0: i32) -> (i32, i32) {
    %c0_i32 = arith.constant 0 : i32
    %c0_i32_0 = arith.constant 0 : i32
    %c0_i32_1 = arith.constant 0 : i32
    return %c0_i32, %c0_i32_0 : i32, i32
  }
  func.func @transform_11(%arg0: i32) -> (i32, i32) {
    %c0_i32 = arith.constant 0 : i32
    %c0_i32_0 = arith.constant 0 : i32
    %c0_i32_1 = arith.constant 0 : i32
    return %c0_i32, %c0_i32_0 : i32, i32
  }
  func.func @transform_12(%arg0: i32) -> (i32, i32) {
    %c0_i32 = arith.constant 0 : i32
    %c0_i32_0 = arith.constant 0 : i32
    return %arg0, %c0_i32 : i32, i32
  }
}

</mosaic_0001>

<llo_original>
// kernel: tpu_custom_call.1
$region0: #{tpu_custom_call.1}
  #allocation0 [shape = 'u32[]', space=smem, size = 0x4, offset = 0x4, fixed_abs, tag = 'smem constant byte address 0x4 - core index']
  #allocation1 [shape = 'u32[72,128]{1,0:T(1,128)}', space=vmem, size = 0x9000, scoped, tag = 'internal scratch']
  #allocation2 [shape = 'f32[1,1]{1,0:T(1,128)S(1)}', space=vmem, size = 0x200, scoped, tag = 'scoped memory for tpu_custom_call.1']
  %s0 = inlined_call_operand.vmem [shape: f32[32,16], index: 0, kind: input, shape index: {}]
  %s1 = inlined_call_operand.vmem [shape: f32[32,16], index: 1, kind: input, shape index: {}]
  %s2 = inlined_call_operand.vmem [shape: f32[32,16], index: 2, kind: input, shape index: {}]
  %s3 = inlined_call_operand.vmem [shape: f32[32,16], index: 3, kind: input, shape index: {}]
  %s4 = inlined_call_operand.vmem [shape: f32[32,16], index: 4, kind: input, shape index: {}]
  %s5 = inlined_call_operand.vmem [shape: f32[32,16], index: 5, kind: input, shape index: {}]
  %s6 = inlined_call_operand.vmem [shape: f32[96,64], index: 6, kind: input, shape index: {}]
  %s7 = inlined_call_operand.vmem [shape: f32[1,64], index: 7, kind: input, shape index: {}]
  %s8 = inlined_call_operand.vmem [shape: f32[64,32], index: 8, kind: input, shape index: {}]
  %s9 = inlined_call_operand.vmem [shape: f32[1,32], index: 9, kind: input, shape index: {}]
  %s10 = inlined_call_operand.vmem [shape: f32[1,32], index: 10, kind: input, shape index: {}]
  %s11 = inlined_call_operand.<no memory space> [shape: f32[1,1], index: 11, kind: input, shape index: {}]
  %s12 = inlined_call_operand.vmem [shape: f32[32,1], index: 12, kind: output, shape index: {}]
  %s13 = sld [smem:[#allocation0]]
  $region81: #{tpu_custom_call.1} parent=0
    _
  %s15 = ssub.s32 1, %s13
  %s16 = scalar_select 0, %s15, %s13
  %v17 = vstv %s11
  %18 = vst [vmem:[#allocation2] sm:$0x1] %v17
  loop: start=0, step=1, limit=6
  $region2: #{tpu_custom_call.1} parent=0 // loop_pre_header
    _
  $region3: #{tpu_custom_call.1} parent=0 // loop_header
    %s20 = sphi 0, %s24
    %p21 = scmp.ge.s32.totalorder %s20, 6
    %s30 = sphi 0, %s32
    %s33 = sphi 0, %s30
    %s34 = sphi 0, %s33
    %s50 = sphi 0, %s34
    %s56 = sphi 0, %s58
    %s59 = sphi 0, %s56
    %s60 = sphi 0, %s59
    %s76 = sphi 0, %s60
    %s82 = sphi 0, %s84
    %s85 = sphi 0, %s82
    %s86 = sphi 0, %s85
    %s102 = sphi 0, %s86
    %s108 = sphi 0, %s110
    %s111 = sphi 0, %s108
    %s112 = sphi 0, %s111
    %s128 = sphi 0, %s112
    %s134 = sphi 0, %s136
    %s137 = sphi 0, %s134
    %s138 = sphi 0, %s137
    %s154 = sphi 0, %s138
    %s160 = sphi 0, %s162
    %s163 = sphi 0, %s160
    %s164 = sphi 0, %s163
    %s180 = sphi 0, %s164
    %s184 = sphi 0, %s184
    %s186 = sphi 0, %s184
    %s187 = sphi 0, %s186
    %s201 = sphi 0, %s187
    %s205 = sphi 0, %s205
    %s207 = sphi 0, %s205
    %s208 = sphi 0, %s207
    %s222 = sphi 0, %s208
    %s226 = sphi 0, %s226
    %s228 = sphi 0, %s226
    %s229 = sphi 0, %s228
    %s243 = sphi 0, %s229
    %s247 = sphi 0, %s247
    %s249 = sphi 0, %s247
    %s250 = sphi 0, %s249
    %s264 = sphi 0, %s250
    %s268 = sphi 0, %s268
    %s270 = sphi 0, %s268
    %s271 = sphi 0, %s270
    %s285 = sphi 0, %s271
    %s289 = sphi 0, %s289
    %s291 = sphi 0, %s289
    %s292 = sphi 0, %s291
    %s306 = sphi 0, %s292
    %s312 = sphi 0, %s314
    %s315 = sphi 0, %s312
    %s316 = sphi 0, %s315
    %s332 = sphi 0, %s316
  $region4: #{tpu_custom_call.1} parent=0 // loop_header_branch
    %23 = sbr.rel (%p21) target = $region8
  $region5: #{tpu_custom_call.1} parent=0 // loop_body
    %s25 = ssub.s32 %s20, 1
    %s26 = ssub.s32 %s20, 2
    %s27 = sadd.s32 %s20, 1
    %s28 = ssub.s32 %s20, %s27
    %p29 = scmp.eq.s32.totalorder %s28, 0
    %s31 = sadd.s32 %s30, 1
    %s32 = scalar_select %p29, %s30, %s31
    %p35 = pneg %p29
    %p36 = scmp.eq.s32.totalorder %s20, 3
    %p37 = por %p35, %p36
    %p38 = scmp.ne.s32.totalorder %s30, %s33
    %p39 = scmp.eq.s32.totalorder %s20, 0
    %p40 = por %p38, %p39
    %p41 = scmp.ne.s32.totalorder %s30, %s33
    %p42 = scmp.eq.s32.totalorder %s25, 3
    %p43 = por %p41, %p42
    %p44 = scmp.ne.s32.totalorder %s33, %s34
    %p45 = scmp.eq.s32.totalorder %s25, 0
    %p46 = por %p44, %p45
    %p47 = scmp.ne.s32.totalorder %s33, %s34
    %p48 = scmp.eq.s32.totalorder %s26, 3
    %p49 = por %p47, %p48
    %p51 = scmp.ne.s32.totalorder %s34, %s50
    %p52 = scmp.eq.s32.totalorder %s26, 0
    %p53 = por %p51, %p52
    %s54 = ssub.s32 %s20, %s27
    %p55 = scmp.eq.s32.totalorder %s54, 0
    %s57 = sadd.s32 %s56, 1
    %s58 = scalar_select %p55, %s56, %s57
    %p61 = pneg %p55
    %p62 = scmp.eq.s32.totalorder %s20, 3
    %p63 = por %p61, %p62
    %p64 = scmp.ne.s32.totalorder %s56, %s59
    %p65 = scmp.eq.s32.totalorder %s20, 0
    %p66 = por %p64, %p65
    %p67 = scmp.ne.s32.totalorder %s56, %s59
    %p68 = scmp.eq.s32.totalorder %s25, 3
    %p69 = por %p67, %p68
    %p70 = scmp.ne.s32.totalorder %s59, %s60
    %p71 = scmp.eq.s32.totalorder %s25, 0
    %p72 = por %p70, %p71
    %p73 = scmp.ne.s32.totalorder %s59, %s60
    %p74 = scmp.eq.s32.totalorder %s26, 3
    %p75 = por %p73, %p74
    %p77 = scmp.ne.s32.totalorder %s60, %s76
    %p78 = scmp.eq.s32.totalorder %s26, 0
    %p79 = por %p77, %p78
    %s80 = ssub.s32 %s20, %s27
    %p81 = scmp.eq.s32.totalorder %s80, 0
    %s83 = sadd.s32 %s82, 1
    %s84 = scalar_select %p81, %s82, %s83
    %p87 = pneg %p81
    %p88 = scmp.eq.s32.totalorder %s20, 3
    %p89 = por %p87, %p88
    %p90 = scmp.ne.s32.totalorder %s82, %s85
    %p91 = scmp.eq.s32.totalorder %s20, 0
    %p92 = por %p90, %p91
    %p93 = scmp.ne.s32.totalorder %s82, %s85
    %p94 = scmp.eq.s32.totalorder %s25, 3
    %p95 = por %p93, %p94
    %p96 = scmp.ne.s32.totalorder %s85, %s86
    %p97 = scmp.eq.s32.totalorder %s25, 0
    %p98 = por %p96, %p97
    %p99 = scmp.ne.s32.totalorder %s85, %s86
    %p100 = scmp.eq.s32.totalorder %s26, 3
    %p101 = por %p99, %p100
    %p103 = scmp.ne.s32.totalorder %s86, %s102
    %p104 = scmp.eq.s32.totalorder %s26, 0
    %p105 = por %p103, %p104
    %s106 = ssub.s32 %s20, %s27
    %p107 = scmp.eq.s32.totalorder %s106, 0
    %s109 = sadd.s32 %s108, 1
    %s110 = scalar_select %p107, %s108, %s109
    %p113 = pneg %p107
    %p114 = scmp.eq.s32.totalorder %s20, 3
    %p115 = por %p113, %p114
    %p116 = scmp.ne.s32.totalorder %s108, %s111
    %p117 = scmp.eq.s32.totalorder %s20, 0
    %p118 = por %p116, %p117
    %p119 = scmp.ne.s32.totalorder %s108, %s111
    %p120 = scmp.eq.s32.totalorder %s25, 3
    %p121 = por %p119, %p120
    %p122 = scmp.ne.s32.totalorder %s111, %s112
    %p123 = scmp.eq.s32.totalorder %s25, 0
    %p124 = por %p122, %p123
    %p125 = scmp.ne.s32.totalorder %s111, %s112
    %p126 = scmp.eq.s32.totalorder %s26, 3
    %p127 = por %p125, %p126
    %p129 = scmp.ne.s32.totalorder %s112, %s128
    %p130 = scmp.eq.s32.totalorder %s26, 0
    %p131 = por %p129, %p130
    %s132 = ssub.s32 %s20, %s27
    %p133 = scmp.eq.s32.totalorder %s132, 0
    %s135 = sadd.s32 %s134, 1
    %s136 = scalar_select %p133, %s134, %s135
    %p139 = pneg %p133
    %p140 = scmp.eq.s32.totalorder %s20, 3
    %p141 = por %p139, %p140
    %p142 = scmp.ne.s32.totalorder %s134, %s137
    %p143 = scmp.eq.s32.totalorder %s20, 0
    %p144 = por %p142, %p143
    %p145 = scmp.ne.s32.totalorder %s134, %s137
    %p146 = scmp.eq.s32.totalorder %s25, 3
    %p147 = por %p145, %p146
    %p148 = scmp.ne.s32.totalorder %s137, %s138
    %p149 = scmp.eq.s32.totalorder %s25, 0
    %p150 = por %p148, %p149
    %p151 = scmp.ne.s32.totalorder %s137, %s138
    %p152 = scmp.eq.s32.totalorder %s26, 3
    %p153 = por %p151, %p152
    %p155 = scmp.ne.s32.totalorder %s138, %s154
    %p156 = scmp.eq.s32.totalorder %s26, 0
    %p157 = por %p155, %p156
    %s158 = ssub.s32 %s20, %s27
    %p159 = scmp.eq.s32.totalorder %s158, 0
    %s161 = sadd.s32 %s160, 1
    %s162 = scalar_select %p159, %s160, %s161
    %p165 = pneg %p159
    %p166 = scmp.eq.s32.totalorder %s20, 3
    %p167 = por %p165, %p166
    %p168 = scmp.ne.s32.totalorder %s160, %s163
    %p169 = scmp.eq.s32.totalorder %s20, 0
    %p170 = por %p168, %p169
    %p171 = scmp.ne.s32.totalorder %s160, %s163
    %p172 = scmp.eq.s32.totalorder %s25, 3
    %p173 = por %p171, %p172
    %p174 = scmp.ne.s32.totalorder %s163, %s164
    %p175 = scmp.eq.s32.totalorder %s25, 0
    %p176 = por %p174, %p175
    %p177 = scmp.ne.s32.totalorder %s163, %s164
    %p178 = scmp.eq.s32.totalorder %s26, 3
    %p179 = por %p177, %p178
    %p181 = scmp.ne.s32.totalorder %s164, %s180
    %p182 = scmp.eq.s32.totalorder %s26, 0
    %p183 = por %p181, %p182
    %s185 = sadd.s32 %s184, 1
    %p188 = scmp.eq.s32.totalorder %s20, 3
    %p189 = scmp.ne.s32.totalorder %s184, %s186
    %p190 = scmp.eq.s32.totalorder %s20, 0
    %p191 = por %p189, %p190
    %p192 = scmp.ne.s32.totalorder %s184, %s186
    %p193 = scmp.eq.s32.totalorder %s25, 3
    %p194 = por %p192, %p193
    %p195 = scmp.ne.s32.totalorder %s186, %s187
    %p196 = scmp.eq.s32.totalorder %s25, 0
    %p197 = por %p195, %p196
    %p198 = scmp.ne.s32.totalorder %s186, %s187
    %p199 = scmp.eq.s32.totalorder %s26, 3
    %p200 = por %p198, %p199
    %p202 = scmp.ne.s32.totalorder %s187, %s201
    %p203 = scmp.eq.s32.totalorder %s26, 0
    %p204 = por %p202, %p203
    %s206 = sadd.s32 %s205, 1
    %p209 = scmp.eq.s32.totalorder %s20, 3
    %p210 = scmp.ne.s32.totalorder %s205, %s207
    %p211 = scmp.eq.s32.totalorder %s20, 0
    %p212 = por %p210, %p211
    %p213 = scmp.ne.s32.totalorder %s205, %s207
    %p214 = scmp.eq.s32.totalorder %s25, 3
    %p215 = por %p213, %p214
    %p216 = scmp.ne.s32.totalorder %s207, %s208
    %p217 = scmp.eq.s32.totalorder %s25, 0
    %p218 = por %p216, %p217
    %p219 = scmp.ne.s32.totalorder %s207, %s208
    %p220 = scmp.eq.s32.totalorder %s26, 3
    %p221 = por %p219, %p220
    %p223 = scmp.ne.s32.totalorder %s208, %s222
    %p224 = scmp.eq.s32.totalorder %s26, 0
    %p225 = por %p223, %p224
    %s227 = sadd.s32 %s226, 1
    %p230 = scmp.eq.s32.totalorder %s20, 3
    %p231 = scmp.ne.s32.totalorder %s226, %s228
    %p232 = scmp.eq.s32.totalorder %s20, 0
    %p233 = por %p231, %p232
    %p234 = scmp.ne.s32.totalorder %s226, %s228
    %p235 = scmp.eq.s32.totalorder %s25, 3
    %p236 = por %p234, %p235
    %p237 = scmp.ne.s32.totalorder %s228, %s229
    %p238 = scmp.eq.s32.totalorder %s25, 0
    %p239 = por %p237, %p238
    %p240 = scmp.ne.s32.totalorder %s228, %s229
    %p241 = scmp.eq.s32.totalorder %s26, 3
    %p242 = por %p240, %p241
    %p244 = scmp.ne.s32.totalorder %s229, %s243
    %p245 = scmp.eq.s32.totalorder %s26, 0
    %p246 = por %p244, %p245
    %s248 = sadd.s32 %s247, 1
    %p251 = scmp.eq.s32.totalorder %s20, 3
    %p252 = scmp.ne.s32.totalorder %s247, %s249
    %p253 = scmp.eq.s32.totalorder %s20, 0
    %p254 = por %p252, %p253
    %p255 = scmp.ne.s32.totalorder %s247, %s249
    %p256 = scmp.eq.s32.totalorder %s25, 3
    %p257 = por %p255, %p256
    %p258 = scmp.ne.s32.totalorder %s249, %s250
    %p259 = scmp.eq.s32.totalorder %s25, 0
    %p260 = por %p258, %p259
    %p261 = scmp.ne.s32.totalorder %s249, %s250
    %p262 = scmp.eq.s32.totalorder %s26, 3
    %p263 = por %p261, %p262
    %p265 = scmp.ne.s32.totalorder %s250, %s264
    %p266 = scmp.eq.s32.totalorder %s26, 0
    %p267 = por %p265, %p266
    %s269 = sadd.s32 %s268, 1
    %p272 = scmp.eq.s32.totalorder %s20, 3
    %p273 = scmp.ne.s32.totalorder %s268, %s270
    %p274 = scmp.eq.s32.totalorder %s20, 0
    %p275 = por %p273, %p274
    %p276 = scmp.ne.s32.totalorder %s268, %s270
    %p277 = scmp.eq.s32.totalorder %s25, 3
    %p278 = por %p276, %p277
    %p279 = scmp.ne.s32.totalorder %s270, %s271
    %p280 = scmp.eq.s32.totalorder %s25, 0
    %p281 = por %p279, %p280
    %p282 = scmp.ne.s32.totalorder %s270, %s271
    %p283 = scmp.eq.s32.totalorder %s26, 3
    %p284 = por %p282, %p283
    %p286 = scmp.ne.s32.totalorder %s271, %s285
    %p287 = scmp.eq.s32.totalorder %s26, 0
    %p288 = por %p286, %p287
    %s290 = sadd.s32 %s289, 1
    %p293 = scmp.eq.s32.totalorder %s20, 3
    %p294 = scmp.ne.s32.totalorder %s289, %s291
    %p295 = scmp.eq.s32.totalorder %s20, 0
    %p296 = por %p294, %p295
    %p297 = scmp.ne.s32.totalorder %s289, %s291
    %p298 = scmp.eq.s32.totalorder %s25, 3
    %p299 = por %p297, %p298
    %p300 = scmp.ne.s32.totalorder %s291, %s292
    %p301 = scmp.eq.s32.totalorder %s25, 0
    %p302 = por %p300, %p301
    %p303 = scmp.ne.s32.totalorder %s291, %s292
    %p304 = scmp.eq.s32.totalorder %s26, 3
    %p305 = por %p303, %p304
    %p307 = scmp.ne.s32.totalorder %s292, %s306
    %p308 = scmp.eq.s32.totalorder %s26, 0
    %p309 = por %p307, %p308
    %s310 = ssub.s32 %s20, %s27
    %p311 = scmp.eq.s32.totalorder %s310, 0
    %s313 = sadd.s32 %s312, 1
    %s314 = scalar_select %p311, %s312, %s313
    %p317 = pneg %p311
    %p318 = scmp.eq.s32.totalorder %s20, 3
    %p319 = por %p317, %p318
    %p320 = scmp.ne.s32.totalorder %s312, %s315
    %p321 = scmp.eq.s32.totalorder %s20, 0
    %p322 = por %p320, %p321
    %p323 = scmp.ne.s32.totalorder %s312, %s315
    %p324 = scmp.eq.s32.totalorder %s25, 3
    %p325 = por %p323, %p324
    %p326 = scmp.ne.s32.totalorder %s315, %s316
    %p327 = scmp.eq.s32.totalorder %s25, 0
    %p328 = por %p326, %p327
    %p329 = scmp.ne.s32.totalorder %s315, %s316
    %p330 = scmp.eq.s32.totalorder %s26, 3
    %p331 = por %p329, %p330
    %p333 = scmp.ne.s32.totalorder %s316, %s332
    %p334 = scmp.eq.s32.totalorder %s26, 0
    %p335 = por %p333, %p334
    %p336 = scmp.le.s32.totalorder 1, %s20
    %p337 = scmp.lt.s32.totalorder %s20, 5
    %p338 = pnand %p336, %p337
    %p339 = pneg %p338
    // Predicated region
    $region9: #{tpu_custom_call.1} parent=5 // pred_check
      _
    $region10: #{tpu_custom_call.1} parent=5 // pred_check_branch
      %341 = sbr.rel (%p338) target = $region12
    $region11: #{tpu_custom_call.1} parent=5 // pred_region
      %s342 = ssub.s32 %s20, 1
      // Predicated region
      $region13: #{tpu_custom_call.1} parent=11 // pred_check
        %p343 = pneg %p197
      $region14: #{tpu_custom_call.1} parent=11 // pred_check_branch
        %345 = sbr.rel (%p343) target = $region16
      $region15: #{tpu_custom_call.1} parent=11 // pred_region
        _
      $region16: #{tpu_custom_call.1} parent=11 // pred_fallthru
        _
      // Predicated region
      $region17: #{tpu_custom_call.1} parent=11 // pred_check
        %p346 = pneg %p218
      $region18: #{tpu_custom_call.1} parent=11 // pred_check_branch
        %348 = sbr.rel (%p346) target = $region20
      $region19: #{tpu_custom_call.1} parent=11 // pred_region
        _
      $region20: #{tpu_custom_call.1} parent=11 // pred_fallthru
        _
      // Predicated region
      $region21: #{tpu_custom_call.1} parent=11 // pred_check
        %p349 = pneg %p239
      $region22: #{tpu_custom_call.1} parent=11 // pred_check_branch
        %351 = sbr.rel (%p349) target = $region24
      $region23: #{tpu_custom_call.1} parent=11 // pred_region
        _
      $region24: #{tpu_custom_call.1} parent=11 // pred_fallthru
        _
      // Predicated region
      $region25: #{tpu_custom_call.1} parent=11 // pred_check
        %p352 = pneg %p260
      $region26: #{tpu_custom_call.1} parent=11 // pred_check_branch
        %354 = sbr.rel (%p352) target = $region28
      $region27: #{tpu_custom_call.1} parent=11 // pred_region
        _
      $region28: #{tpu_custom_call.1} parent=11 // pred_fallthru
        _
      // Predicated region
      $region29: #{tpu_custom_call.1} parent=11 // pred_check
        %p355 = pneg %p281
      $region30: #{tpu_custom_call.1} parent=11 // pred_check_branch
        %357 = sbr.rel (%p355) target = $region32
      $region31: #{tpu_custom_call.1} parent=11 // pred_region
        _
      $region32: #{tpu_custom_call.1} parent=11 // pred_fallthru
        _
      // Predicated region
      $region33: #{tpu_custom_call.1} parent=11 // pred_check
        %p358 = pneg %p302
      $region34: #{tpu_custom_call.1} parent=11 // pred_check_branch
        %360 = sbr.rel (%p358) target = $region36
      $region35: #{tpu_custom_call.1} parent=11 // pred_region
        _
      $region36: #{tpu_custom_call.1} parent=11 // pred_fallthru
        _
    $region12: #{tpu_custom_call.1} parent=5 // pred_fallthru
      _
    %p361 = scmp.lt.s32.totalorder %s20, 4
    // Predicated region
    $region37: #{tpu_custom_call.1} parent=5 // pred_check
      %p362 = pneg %p361
    $region38: #{tpu_custom_call.1} parent=5 // pred_check_branch
      %364 = sbr.rel (%p362) target = $region40
    $region39: #{tpu_custom_call.1} parent=5 // pred_region
      // Predicated region
      $region41: #{tpu_custom_call.1} parent=39 // pred_check
        %p365 = pneg %p40
      $region42: #{tpu_custom_call.1} parent=39 // pred_check_branch
        %367 = sbr.rel (%p365) target = $region44
      $region43: #{tpu_custom_call.1} parent=39 // pred_region
        %p368 = scmp.lt.s32.totalorder %s20, 3
        %s369 = scalar_select %p368, %s20, 3
        %s370 = smul.addr %s369, 8
        %s371 = scalar_lea.vmem %s0, %s370
      $region44: #{tpu_custom_call.1} parent=39 // pred_fallthru
        _
      // Predicated region
      $region45: #{tpu_custom_call.1} parent=39 // pred_check
        %p372 = pneg %p66
      $region46: #{tpu_custom_call.1} parent=39 // pred_check_branch
        %374 = sbr.rel (%p372) target = $region48
      $region47: #{tpu_custom_call.1} parent=39 // pred_region
        %p375 = scmp.lt.s32.totalorder %s20, 3
        %s376 = scalar_select %p375, %s20, 3
        %s377 = smul.addr %s376, 8
        %s378 = scalar_lea.vmem %s1, %s377
      $region48: #{tpu_custom_call.1} parent=39 // pred_fallthru
        _
      // Predicated region
      $region49: #{tpu_custom_call.1} parent=39 // pred_check
        %p379 = pneg %p92
      $region50: #{tpu_custom_call.1} parent=39 // pred_check_branch
        %381 = sbr.rel (%p379) target = $region52
      $region51: #{tpu_custom_call.1} parent=39 // pred_region
        %p382 = scmp.lt.s32.totalorder %s20, 3
        %s383 = scalar_select %p382, %s20, 3
        %s384 = smul.addr %s383, 8
        %s385 = scalar_lea.vmem %s2, %s384
      $region52: #{tpu_custom_call.1} parent=39 // pred_fallthru
        _
      // Predicated region
      $region53: #{tpu_custom_call.1} parent=39 // pred_check
        %p386 = pneg %p118
      $region54: #{tpu_custom_call.1} parent=39 // pred_check_branch
        %388 = sbr.rel (%p386) target = $region56
      $region55: #{tpu_custom_call.1} parent=39 // pred_region
        %p389 = scmp.lt.s32.totalorder %s20, 3
        %s390 = scalar_select %p389, %s20, 3
        %s391 = smul.addr %s390, 8
        %s392 = scalar_lea.vmem %s3, %s391
      $region56: #{tpu_custom_call.1} parent=39 // pred_fallthru
        _
      // Predicated region
      $region57: #{tpu_custom_call.1} parent=39 // pred_check
        %p393 = pneg %p144
      $region58: #{tpu_custom_call.1} parent=39 // pred_check_branch
        %395 = sbr.rel (%p393) target = $region60
      $region59: #{tpu_custom_call.1} parent=39 // pred_region
        %p396 = scmp.lt.s32.totalorder %s20, 3
        %s397 = scalar_select %p396, %s20, 3
        %s398 = smul.addr %s397, 8
        %s399 = scalar_lea.vmem %s4, %s398
      $region60: #{tpu_custom_call.1} parent=39 // pred_fallthru
        _
      // Predicated region
      $region61: #{tpu_custom_call.1} parent=39 // pred_check
        %p400 = pneg %p170
      $region62: #{tpu_custom_call.1} parent=39 // pred_check_branch
        %402 = sbr.rel (%p400) target = $region64
      $region63: #{tpu_custom_call.1} parent=39 // pred_region
        %p403 = scmp.lt.s32.totalorder %s20, 3
        %s404 = scalar_select %p403, %s20, 3
        %s405 = smul.addr %s404, 8
        %s406 = scalar_lea.vmem %s5, %s405
      $region64: #{tpu_custom_call.1} parent=39 // pred_fallthru
        _
    $region40: #{tpu_custom_call.1} parent=5 // pred_fallthru
      _
    %p407 = scmp.le.s32.totalorder 1, %s20
    %p408 = scmp.lt.s32.totalorder %s20, 5
    %p409 = pnand %p407, %p408
    %p410 = pneg %p409
    // Predicated region
    $region65: #{tpu_custom_call.1} parent=5 // pred_check
      _
    $region66: #{tpu_custom_call.1} parent=5 // pred_check_branch
      %412 = sbr.rel (%p409) target = $region68
    $region67: #{tpu_custom_call.1} parent=5 // pred_region
      %s413 = ssub.s32 %s20, 1
      %p414 = scmp.lt.s32.totalorder %s25, 3
      %s415 = scalar_select %p414, %s25, 3
      %s416 = smul.addr %s415, 8
      %s417 = scalar_lea.vmem %s0, %s416
      %p418 = pneg %p46
      %p419 = pneg %p43
      %p420 = scmp.lt.s32.totalorder %s25, 3
      %s421 = scalar_select %p420, %s25, 3
      %s422 = smul.addr %s421, 8
      %s423 = scalar_lea.vmem %s1, %s422
      %p424 = pneg %p72
      %p425 = pneg %p69
      %p426 = scmp.lt.s32.totalorder %s25, 3
      %s427 = scalar_select %p426, %s25, 3
      %s428 = smul.addr %s427, 8
      %s429 = scalar_lea.vmem %s2, %s428
      %p430 = pneg %p98
      %p431 = pneg %p95
      %p432 = scmp.lt.s32.totalorder %s25, 3
      %s433 = scalar_select %p432, %s25, 3
      %s434 = smul.addr %s433, 8
      %s435 = scalar_lea.vmem %s3, %s434
      %p436 = pneg %p124
      %p437 = pneg %p121
      %p438 = scmp.lt.s32.totalorder %s25, 3
      %s439 = scalar_select %p438, %s25, 3
      %s440 = smul.addr %s439, 8
      %s441 = scalar_lea.vmem %s4, %s440
      %p442 = pneg %p150
      %p443 = pneg %p147
      %p444 = scmp.lt.s32.totalorder %s25, 3
      %s445 = scalar_select %p444, %s25, 3
      %s446 = smul.addr %s445, 8
      %s447 = scalar_lea.vmem %s5, %s446
      %p448 = pneg %p176
      %p449 = pneg %p173
      %p450 = pneg %p197
      %p451 = pneg %p194
      %p452 = pneg %p218
      %p453 = pneg %p215
      %p454 = pneg %p239
      %p455 = pneg %p236
      %p456 = pneg %p260
      %p457 = pneg %p257
      %p458 = pneg %p281
      %p459 = pneg %p278
      %p460 = pneg %p302
      %p461 = pneg %p299
      %p462 = pneg %p328
      %p463 = pneg %p325
      %p464 = scmp.lt.s32.totalorder %s25, 3
      %s465 = scalar_select %p464, %s25, 3
      %s466 = smul.addr %s465, 8
      %s467 = scalar_lea.vmem %s12, %s466
      %p468 = scmp.lt.s32.totalorder %s25, 3
      %s469 = scalar_select %p468, %s25, 3
      %s470 = smul.addr %s469, 8
      %s471 = scalar_lea.vmem %s0, %s470
      %p472 = scmp.lt.s32.totalorder %s25, 3
      %s473 = scalar_select %p472, %s25, 3
      %s474 = smul.addr %s473, 8
      %s475 = scalar_lea.vmem %s1, %s474
      %p476 = scmp.lt.s32.totalorder %s25, 3
      %s477 = scalar_select %p476, %s25, 3
      %s478 = smul.addr %s477, 8
      %s479 = scalar_lea.vmem %s2, %s478
      %p480 = scmp.lt.s32.totalorder %s25, 3
      %s481 = scalar_select %p480, %s25, 3
      %s482 = smul.addr %s481, 8
      %s483 = scalar_lea.vmem %s3, %s482
      %p484 = scmp.lt.s32.totalorder %s25, 3
      %s485 = scalar_select %p484, %s25, 3
      %s486 = smul.addr %s485, 8
      %s487 = scalar_lea.vmem %s4, %s486
      %p488 = scmp.lt.s32.totalorder %s25, 3
      %s489 = scalar_select %p488, %s25, 3
      %s490 = smul.addr %s489, 8
      %s491 = scalar_lea.vmem %s5, %s490
      %p492 = scmp.lt.s32.totalorder %s25, 3
      %s493 = scalar_select %p492, %s25, 3
      %s494 = smul.addr %s493, 8
      %s495 = scalar_lea.vmem %s12, %s494
      %v496 = vld [vmem:[%s471] sm:$0xff]
      %v497 = vld [vmem:[%s6] sm:$0xff]
      %v498 = vld [vmem:[%s6 + $0x8] sm:$0xff]
      %v499 = vld [vmem:[%s475] sm:$0xff]
      %v500 = vld [vmem:[%s6 + $0x10] sm:$0xff]
      %v501 = vld [vmem:[%s6 + $0x18] sm:$0xff]
      %vm502 = vcmask 130048
      %v504 = vsel %vm502, %v499, 0
      %506 = vmatpush.msra.mxu0 0.0
      %507 = vmatpush.msra.mxu0 0.0
      %508 = vmatpush.msra.mxu0 0.0
      %509 = vmatpush.msra.mxu0 0.0
      %510 = vmatpush.msra.mxu0 0.0
      %511 = vmatpush.msra.mxu0 0.0
      %512 = vmatpush.msra.mxu0 0.0
      %513 = vmatpush.msra.mxu0 0.0
      %514 = vmatpush.msra.mxu0 0.0
      %515 = vmatpush.msra.mxu0 0.0
      %516 = vmatpush.msra.mxu0 0.0
      %517 = vmatpush.msra.mxu0 0.0
      %518 = vmatpush.msra.mxu0 0.0
      %519 = vmatpush.msra.mxu0 0.0
      %520 = vmatpush.msra.mxu0 %v501
      %521 = vmatpush.msra.mxu0 %v500
      %522 = vmatmul.f32.gmra.mxu0 %v504
      %v523 = vpop.f32.mrf.mxu0
      %v524 = vadd.f32 0.0, %v523
      %525 = vdwg.mxu0
      %v527 = vsel %vm502, %v496, 0
      %529 = vmatpush.msra.mxu0 0.0
      %530 = vmatpush.msra.mxu0 0.0
      %531 = vmatpush.msra.mxu0 0.0
      %532 = vmatpush.msra.mxu0 0.0
      %533 = vmatpush.msra.mxu0 0.0
      %534 = vmatpush.msra.mxu0 0.0
      %535 = vmatpush.msra.mxu0 0.0
      %536 = vmatpush.msra.mxu0 0.0
      %537 = vmatpush.msra.mxu0 0.0
      %538 = vmatpush.msra.mxu0 0.0
      %539 = vmatpush.msra.mxu0 0.0
      %540 = vmatpush.msra.mxu0 0.0
      %541 = vmatpush.msra.mxu0 0.0
      %542 = vmatpush.msra.mxu0 0.0
      %543 = vmatpush.msra.mxu0 %v498
      %544 = vmatpush.msra.mxu0 %v497
      %545 = vmatmul.f32.gmra.mxu0 %v527
      %v546 = vpop.f32.mrf.mxu0
      %v547 = vadd.f32 %v524, %v546
      %548 = vdwg.mxu0
      %v549 = vld [vmem:[%s479] sm:$0xff]
      %v550 = vld [vmem:[%s6 + $0x20] sm:$0xff]
      %v551 = vld [vmem:[%s6 + $0x28] sm:$0xff]
      %v553 = vsel %vm502, %v549, 0
      %555 = vmatpush.msra.mxu0 0.0
      %556 = vmatpush.msra.mxu0 0.0
      %557 = vmatpush.msra.mxu0 0.0
      %558 = vmatpush.msra.mxu0 0.0
      %559 = vmatpush.msra.mxu0 0.0
      %560 = vmatpush.msra.mxu0 0.0
      %561 = vmatpush.msra.mxu0 0.0
      %562 = vmatpush.msra.mxu0 0.0
      %563 = vmatpush.msra.mxu0 0.0
      %564 = vmatpush.msra.mxu0 0.0
      %565 = vmatpush.msra.mxu0 0.0
      %566 = vmatpush.msra.mxu0 0.0
      %567 = vmatpush.msra.mxu0 0.0
      %568 = vmatpush.msra.mxu0 0.0
      %569 = vmatpush.msra.mxu0 %v551
      %570 = vmatpush.msra.mxu0 %v550
      %571 = vmatmul.f32.gmra.mxu0 %v553
      %v572 = vpop.f32.mrf.mxu0
      %v573 = vadd.f32 0.0, %v572
      %574 = vdwg.mxu0
      %v575 = vadd.f32 %v547, %v573
      %v576 = vld [vmem:[%s483] sm:$0xff]
      %v577 = vld [vmem:[%s6 + $0x30] sm:$0xff]
      %v578 = vld [vmem:[%s6 + $0x38] sm:$0xff]
      %v580 = vsel %vm502, %v576, 0
      %582 = vmatpush.msra.mxu0 0.0
      %583 = vmatpush.msra.mxu0 0.0
      %584 = vmatpush.msra.mxu0 0.0
      %585 = vmatpush.msra.mxu0 0.0
      %586 = vmatpush.msra.mxu0 0.0
      %587 = vmatpush.msra.mxu0 0.0
      %588 = vmatpush.msra.mxu0 0.0
      %589 = vmatpush.msra.mxu0 0.0
      %590 = vmatpush.msra.mxu0 0.0
      %591 = vmatpush.msra.mxu0 0.0
      %592 = vmatpush.msra.mxu0 0.0
      %593 = vmatpush.msra.mxu0 0.0
      %594 = vmatpush.msra.mxu0 0.0
      %595 = vmatpush.msra.mxu0 0.0
      %596 = vmatpush.msra.mxu0 %v578
      %597 = vmatpush.msra.mxu0 %v577
      %598 = vmatmul.f32.gmra.mxu0 %v580
      %v599 = vpop.f32.mrf.mxu0
      %v600 = vadd.f32 0.0, %v599
      %601 = vdwg.mxu0
      %v602 = vadd.f32 %v575, %v600
      %v603 = vld [vmem:[%s487] sm:$0xff]
      %v604 = vld [vmem:[%s6 + $0x40] sm:$0xff]
      %v605 = vld [vmem:[%s6 + $0x48] sm:$0xff]
      %v607 = vsel %vm502, %v603, 0
      %609 = vmatpush.msra.mxu0 0.0
      %610 = vmatpush.msra.mxu0 0.0
      %611 = vmatpush.msra.mxu0 0.0
      %612 = vmatpush.msra.mxu0 0.0
      %613 = vmatpush.msra.mxu0 0.0
      %614 = vmatpush.msra.mxu0 0.0
      %615 = vmatpush.msra.mxu0 0.0
      %616 = vmatpush.msra.mxu0 0.0
      %617 = vmatpush.msra.mxu0 0.0
      %618 = vmatpush.msra.mxu0 0.0
      %619 = vmatpush.msra.mxu0 0.0
      %620 = vmatpush.msra.mxu0 0.0
      %621 = vmatpush.msra.mxu0 0.0
      %622 = vmatpush.msra.mxu0 0.0
      %623 = vmatpush.msra.mxu0 %v605
      %624 = vmatpush.msra.mxu0 %v604
      %625 = vmatmul.f32.gmra.mxu0 %v607
      %v626 = vpop.f32.mrf.mxu0
      %v627 = vadd.f32 0.0, %v626
      %628 = vdwg.mxu0
      %v629 = vadd.f32 %v602, %v627
      %v630 = vld [vmem:[%s491] sm:$0xff]
      %v631 = vld [vmem:[%s6 + $0x50] sm:$0xff]
      %v632 = vld [vmem:[%s6 + $0x58] sm:$0xff]
      %v634 = vsel %vm502, %v630, 0
      %636 = vmatpush.msra.mxu0 0.0
      %637 = vmatpush.msra.mxu0 0.0
      %638 = vmatpush.msra.mxu0 0.0
      %639 = vmatpush.msra.mxu0 0.0
      %640 = vmatpush.msra.mxu0 0.0
      %641 = vmatpush.msra.mxu0 0.0
      %642 = vmatpush.msra.mxu0 0.0
      %643 = vmatpush.msra.mxu0 0.0
      %644 = vmatpush.msra.mxu0 0.0
      %645 = vmatpush.msra.mxu0 0.0
      %646 = vmatpush.msra.mxu0 0.0
      %647 = vmatpush.msra.mxu0 0.0
      %648 = vmatpush.msra.mxu0 0.0
      %649 = vmatpush.msra.mxu0 0.0
      %650 = vmatpush.msra.mxu0 %v632
      %651 = vmatpush.msra.mxu0 %v631
      %652 = vmatmul.f32.gmra.mxu0 %v634
      %v653 = vpop.f32.mrf.mxu0
      %v654 = vadd.f32 0.0, %v653
      %655 = vdwg.mxu0
      %v656 = vadd.f32 %v629, %v654
      %v657 = vld [vmem:[%s7] sm:$0x1]
      %v659 = vperm.slane %v657, 0
      %v661 = vadd.f32 %v656, %v659
      %v662 = vmax.f32 %v661, 0.0
      %v663 = vld [vmem:[%s8] sm:$0xff]
      %v664 = vld [vmem:[%s8 + $0x8] sm:$0xff]
      %v665 = vld [vmem:[%s8 + $0x10] sm:$0xff]
      %v666 = vld [vmem:[%s8 + $0x18] sm:$0xff]
      %v667 = vld [vmem:[%s8 + $0x20] sm:$0xff]
      %v668 = vld [vmem:[%s8 + $0x28] sm:$0xff]
      %v669 = vld [vmem:[%s8 + $0x30] sm:$0xff]
      %v670 = vld [vmem:[%s8 + $0x38] sm:$0xff]
      %v671 = vld [vmem:[%s9] sm:$0x1]
      %v673 = vperm.slane %v671, 0
      %vm675 = vcmask 523264
      %v677 = vsel %vm675, %v662, 0
      %679 = vmatpush.msra.mxu0 0.0
      %680 = vmatpush.msra.mxu0 0.0
      %681 = vmatpush.msra.mxu0 0.0
      %682 = vmatpush.msra.mxu0 0.0
      %683 = vmatpush.msra.mxu0 0.0
      %684 = vmatpush.msra.mxu0 0.0
      %685 = vmatpush.msra.mxu0 0.0
      %686 = vmatpush.msra.mxu0 0.0
      %687 = vmatpush.msra.mxu0 %v670
      %688 = vmatpush.msra.mxu0 %v669
      %689 = vmatpush.msra.mxu0 %v668
      %690 = vmatpush.msra.mxu0 %v667
      %691 = vmatpush.msra.mxu0 %v666
      %692 = vmatpush.msra.mxu0 %v665
      %693 = vmatpush.msra.mxu0 %v664
      %694 = vmatpush.msra.mxu0 %v663
      %695 = vmatmul.f32.gmra.mxu0 %v677
      %v696 = vpop.f32.mrf.mxu0
      %v697 = vadd.f32 %v673, %v696
      %698 = vdwg.mxu0
      %v699 = vmax.f32 %v697, 0.0
      %v700 = vld [vmem:[%s10] sm:$0x1]
      %v702 = vperm.slane %v700, 0
      %v704 = vmul.f32 %v699, %v702
      %vm705 = vcmask 261120
      %v706 = vsel %vm705, %v704, 0.0
      %707 = vadd.xlane.f32.xlu0 %v706
      %v708 = vpop.xlane.xlu0 %707
      %v709 = vld [vmem:[#allocation2] sm:$0x1]
      %v711 = vperm.slane %v709, 0
      %v713 = vadd.f32 %v708, %v711
      %v714 = vxor.u32 %v713, 2147483648
      %v715 = vmul.f32 %v714, 1.442695
      %v716 = vpow.pop %v715
      %v717 = vadd.f32 %v716, 1.0
      %v718 = vrcp.pop %v717
      %v719 = vmul.f32 %v717, %v718
      %v720 = vsub.f32 1.0, %v719
      %v721 = vmul.f32 %v718, %v720
      %v722 = vadd.f32 %v718, %v721
      %vm723 = vweird.f32 %v717
      %vm724 = vweird.f32 %v718
      %vm725 = vmor %vm723, %vm724
      %v726 = vsel %vm725, %v718, %v722
      %v727 = vand.u32 2147483647, %v717
      %vm728 = vcmp.eq.f32.partialorder %v727, 8.507059e+37
      %v729 = vand.u32 %v717, 2147483648
      %v730 = vor.u32 1.1754944e-38, %v729
      %v731 = vsel %vm728, %v730, %v726
      %v732 = vmul.f32 1.0, %v731
      %vm733 = vcmask 7168
      %734 = vst.msk [vmem:[%s495] sm:$0xff] %vm733, %v732
      %p735 = scmp.lt.s32.totalorder %s25, 3
      %s736 = scalar_select %p735, %s25, 3
      %s737 = smul.addr %s736, 8
      %s738 = scalar_lea.vmem %s12, %s737
      // Predicated region
      $region69: #{tpu_custom_call.1} parent=67 // pred_check
        %p739 = pneg %p325
      $region70: #{tpu_custom_call.1} parent=67 // pred_check_branch
        %741 = sbr.rel (%p739) target = $region72
      $region71: #{tpu_custom_call.1} parent=67 // pred_region
        _
      $region72: #{tpu_custom_call.1} parent=67 // pred_fallthru
        _
    $region68: #{tpu_custom_call.1} parent=5 // pred_fallthru
      _
    %p742 = scmp.le.s32.totalorder 2, %s20
    // Predicated region
    $region73: #{tpu_custom_call.1} parent=5 // pred_check
      %p743 = pneg %p742
    $region74: #{tpu_custom_call.1} parent=5 // pred_check_branch
      %745 = sbr.rel (%p743) target = $region76
    $region75: #{tpu_custom_call.1} parent=5 // pred_region
      %s746 = ssub.s32 %s20, 2
      // Predicated region
      $region77: #{tpu_custom_call.1} parent=75 // pred_check
        %p747 = pneg %p331
      $region78: #{tpu_custom_call.1} parent=75 // pred_check_branch
        %749 = sbr.rel (%p747) target = $region80
      $region79: #{tpu_custom_call.1} parent=75 // pred_region
        %p750 = scmp.lt.s32.totalorder %s26, 3
        %s751 = scalar_select %p750, %s26, 3
        %s752 = smul.addr %s751, 8
        %s753 = scalar_lea.vmem %s12, %s752
      $region80: #{tpu_custom_call.1} parent=75 // pred_fallthru
        _
    $region76: #{tpu_custom_call.1} parent=5 // pred_fallthru
      _
  $region6: #{tpu_custom_call.1} parent=0 // loop_footer
    %s24 = sadd.s32 1, %s20
  $region7: #{tpu_custom_call.1} parent=0 // loop_footer_branch
    %19 = sbr.rel target = $region3
  $region8: #{tpu_custom_call.1} parent=0 // loop_exit
    _

</llo_original>
